<compile_context>
chip_gen: v5e
topology: v5e:2x2
jax: 0.10.0
libtpu: 0.0.40
codegen_flags: <defaults>
</compile_context>

<pallas_src>
import functools
import math

import jax
import jax.numpy as jnp
from jax import lax
from jax.experimental import pallas as pl
from jax.experimental.pallas import tpu as pltpu


def _erf(z):
    # Abramowitz & Stegun 7.1.26 (|abs err| < 1.5e-7): uses only exp/mul/add,
    # which are guaranteed to lower in Mosaic (erf_p may not).
    p = 0.3275911
    a1, a2, a3, a4, a5 = (0.254829592, -0.284496736, 1.421413741,
                          -1.453152027, 1.061405429)
    az = jnp.abs(z)
    t = 1.0 / (1.0 + p * az)
    poly = ((((a5 * t + a4) * t + a3) * t + a2) * t + a1) * t
    e = 1.0 - poly * jnp.exp(-az * az)
    return jnp.where(z < 0.0, -e, e)


def _gelu_exact(x):
    # matches torch.nn.GELU() default (erf formulation)
    return 0.5 * x * (1.0 + _erf(x * 0.7071067811865476))


def _fefo_kernel(eps, matmul_dtype,
                 x_ref, g_ref, b_ref, w1_ref, b1_ref, w2_ref, b2_ref, o_ref):
    x = x_ref[...].astype(jnp.float32)               # [TM, D]

    # LayerNorm over the feature (lane) dim
    mu = jnp.mean(x, axis=-1, keepdims=True)
    xc = x - mu
    var = jnp.mean(xc * xc, axis=-1, keepdims=True)
    ln = xc * lax.rsqrt(var + eps) * g_ref[...] + b_ref[...]

    def mm(a, w):
        if matmul_dtype is not None:
            a = a.astype(matmul_dtype)
            w = w.astype(matmul_dtype)
        return jnp.dot(a, w, preferred_element_type=jnp.float32)

    h = mm(ln, w1_ref[...]) + b1_ref[...]            # [TM, d_fefo]
    h = _gelu_exact(h)
    # TODO(synk): nn.Dropout is identity here (eval mode / p=0); a training-mode
    # stochastic path would use pltpu.prng_seed + pltpu.stateful_bernoulli.
    y = mm(h, w2_ref[...]) + b2_ref[...]             # [TM, D]

    o_ref[...] = (x + y).astype(o_ref.dtype)         # residual


def _round_up(v, m):
    return (v + m - 1) // m * m


def fefo_attention_pallas(x, params, *, eps=1e-5, dropout=0.0,
                          block_rows=256, matmul_dtype=None):
    """x: [..., d_model] -> [..., d_model], y = x + fefo(x)."""
    del dropout  # identity in eval / p=0 (see TODO in kernel)
    orig_shape = x.shape
    d_model = orig_shape[-1]
    x2 = x.reshape(-1, d_model)
    n = x2.shape[0]

    gamma = params["ln_gamma"].reshape(1, d_model)
    beta = params["ln_beta"].reshape(1, d_model)
    w1 = params["w1"]
    b1 = params["b1"].reshape(1, -1)
    w2 = params["w2"]
    b2 = params["b2"].reshape(1, d_model)
    d_fefo = w1.shape[1]

    # Lane/sublane-dense row blocking: TM up to `block_rows`, rows padded so the
    # grid divides evenly (padded rows are computed and sliced off).
    tm = min(block_rows, _round_up(n, 8))
    n_pad = _round_up(n, tm)
    if n_pad != n:
        x2 = jnp.pad(x2, ((0, n_pad - n), (0, 0)))
    grid = (n_pad // tm,)

    def w_spec(a):
        return pl.BlockSpec(a.shape, lambda i: (0, 0))

    in_specs = [pl.BlockSpec((tm, d_model), lambda i: (i, 0))] + [
        w_spec(a) for a in (gamma, beta, w1, b1, w2, b2)
    ]
    out_spec = pl.BlockSpec((tm, d_model), lambda i: (i, 0))

    weight_bytes = sum(int(a.size) for a in (gamma, beta, w1, b1, w2, b2)) * 4
    cost = pl.CostEstimate(
        flops=4 * n_pad * d_model * d_fefo + 12 * n_pad * (d_model + d_fefo),
        transcendentals=n_pad * d_fefo,
        bytes_accessed=2 * n_pad * d_model * 4 + weight_bytes,
    )

    kernel = functools.partial(_fefo_kernel, float(eps), matmul_dtype)
    out = pl.pallas_call(
        kernel,
        out_shape=jax.ShapeDtypeStruct((n_pad, d_model), x.dtype),
        grid_spec=pltpu.PrefetchScalarGridSpec(
            num_scalar_prefetch=0,
            grid=grid,
            in_specs=in_specs,
            out_specs=out_spec,
        ),
        compiler_params=pltpu.CompilerParams(
            dimension_semantics=("parallel",)),
        cost_estimate=cost,
    )(x2, gamma, beta, w1, b1, w2, b2)

    return out[:n].reshape(orig_shape)


def init_params(key, d_model, d_fefo):
    """Mimics nn.Linear / nn.LayerNorm default init (U(-1/sqrt(fan_in), +), ones/zeros)."""
    k1, k2, k3, k4 = jax.random.split(key, 4)

    def lin(k, fan_in, shape):
        bound = 1.0 / math.sqrt(fan_in)
        return jax.random.uniform(k, shape, jnp.float32, -bound, bound)

    return {
        "ln_gamma": jnp.ones((d_model,), jnp.float32),
        "ln_beta": jnp.zeros((d_model,), jnp.float32),
        "w1": lin(k1, d_model, (d_model, d_fefo)),
        "b1": lin(k2, d_model, (d_fefo,)),
        "w2": lin(k3, d_fefo, (d_fefo, d_model)),
        "b2": lin(k4, d_fefo, (d_model,)),
    }


def _reference(x, params, eps=1e-5):
    mu = jnp.mean(x, -1, keepdims=True)
    var = jnp.mean((x - mu) ** 2, -1, keepdims=True)
    ln = (x - mu) / jnp.sqrt(var + eps) * params["ln_gamma"] + params["ln_beta"]
    h = ln @ params["w1"] + params["b1"]
    h = 0.5 * h * (1.0 + jax.scipy.special.erf(h / jnp.sqrt(2.0)))
    return x + h @ params["w2"] + params["b2"]


if __name__ == "__main__":
    key = jax.random.PRNGKey(0)
    k_param, k_x = jax.random.split(key)

    d_model, d_fefo = 32, 128           # small shapes consistent with the module
    batch, seq = 2, 8
    params = init_params(k_param, d_model, d_fefo)
    x = jax.random.normal(k_x, (batch, seq, d_model), dtype=jnp.float32)

    out = fefo_attention_pallas(x, params, eps=1e-5, dropout=0.0)
    out = jax.block_until_ready(out)

    assert out.shape == x.shape, out.shape
    assert bool(jnp.all(jnp.isfinite(out)))
    ref = _reference(x, params)
    assert float(jnp.max(jnp.abs(out - ref))) < 1e-3, "mismatch vs JAX reference"
    print("KERNEL_OK")
</pallas_src>

<mosaic_0001>
module attributes {stable_mosaic.version = 11 : i64} {
  func.func @_fefo_kernel(%arg0: i32, %arg1: memref<16x32xf32, #tpu.memory_space<vmem>>, %arg2: memref<1x32xf32, #tpu.memory_space<vmem>>, %arg3: memref<1x32xf32, #tpu.memory_space<vmem>>, %arg4: memref<32x128xf32, #tpu.memory_space<vmem>>, %arg5: memref<1x128xf32, #tpu.memory_space<vmem>>, %arg6: memref<128x32xf32, #tpu.memory_space<vmem>>, %arg7: memref<1x32xf32, #tpu.memory_space<vmem>>, %arg8: memref<16x32xf32, #tpu.memory_space<vmem>>) attributes {dimension_semantics = [#tpu.dimension_semantics<parallel>], iteration_bounds = array<i64: 1>, scalar_prefetch = 0 : i64, scratch_operands = 0 : i64, tpu.core_type = #tpu.core_type<tc>, window_params = [{transform_indices = @transform_0, window_bounds = array<i64: 16, 32>}, {pipeline_mode = #tpu.pipeline_mode<synchronous>, transform_indices = @transform_1, window_bounds = array<i64: 1, 32>}, {pipeline_mode = #tpu.pipeline_mode<synchronous>, transform_indices = @transform_2, window_bounds = array<i64: 1, 32>}, {pipeline_mode = #tpu.pipeline_mode<synchronous>, transform_indices = @transform_3, window_bounds = array<i64: 32, 128>}, {pipeline_mode = #tpu.pipeline_mode<synchronous>, transform_indices = @transform_4, window_bounds = array<i64: 1, 128>}, {pipeline_mode = #tpu.pipeline_mode<synchronous>, transform_indices = @transform_5, window_bounds = array<i64: 128, 32>}, {pipeline_mode = #tpu.pipeline_mode<synchronous>, transform_indices = @transform_6, window_bounds = array<i64: 1, 32>}, {transform_indices = @transform_7, window_bounds = array<i64: 16, 32>}]} {
    %c0 = arith.constant 0 : index
    %c0_0 = arith.constant 0 : index
    %0 = vector.load %arg1[%c0, %c0_0] : memref<16x32xf32, #tpu.memory_space<vmem>>, vector<16x32xf32>
    %cst = arith.constant dense<0.000000e+00> : vector<16xf32>
    %1 = vector.multi_reduction <add>, %0, %cst [1] : vector<16x32xf32> to vector<16xf32>
    %2 = vector.shape_cast %1 : vector<16xf32> to vector<16x1xf32>
    %cst_1 = arith.constant 3.200000e+01 : f32
    %3 = vector.broadcast %cst_1 : f32 to vector<16x1xf32>
    %4 = arith.divf %2, %3 : vector<16x1xf32>
    %5 = vector.broadcast %4 : vector<16x1xf32> to vector<16x32xf32>
    %6 = arith.subf %0, %5 : vector<16x32xf32>
    %7 = arith.mulf %6, %6 : vector<16x32xf32>
    %cst_2 = arith.constant dense<0.000000e+00> : vector<16xf32>
    %8 = vector.multi_reduction <add>, %7, %cst_2 [1] : vector<16x32xf32> to vector<16xf32>
    %9 = vector.shape_cast %8 : vector<16xf32> to vector<16x1xf32>
    %cst_3 = arith.constant 3.200000e+01 : f32
    %10 = vector.broadcast %cst_3 : f32 to vector<16x1xf32>
    %11 = arith.divf %9, %10 : vector<16x1xf32>
    %cst_4 = arith.constant 9.99999974E-6 : f32
    %12 = vector.broadcast %cst_4 : f32 to vector<16x1xf32>
    %13 = arith.addf %11, %12 : vector<16x1xf32>
    %14 = math.rsqrt %13 : vector<16x1xf32>
    %15 = vector.broadcast %14 : vector<16x1xf32> to vector<16x32xf32>
    %16 = arith.mulf %6, %15 : vector<16x32xf32>
    %c0_5 = arith.constant 0 : index
    %c0_6 = arith.constant 0 : index
    %17 = vector.load %arg2[%c0_5, %c0_6] : memref<1x32xf32, #tpu.memory_space<vmem>>, vector<1x32xf32>
    %18 = vector.broadcast %17 : vector<1x32xf32> to vector<16x32xf32>
    %19 = arith.mulf %16, %18 : vector<16x32xf32>
    %c0_7 = arith.constant 0 : index
    %c0_8 = arith.constant 0 : index
    %20 = vector.load %arg3[%c0_7, %c0_8] : memref<1x32xf32, #tpu.memory_space<vmem>>, vector<1x32xf32>
    %21 = vector.broadcast %20 : vector<1x32xf32> to vector<16x32xf32>
    %22 = arith.addf %19, %21 : vector<16x32xf32>
    %c0_9 = arith.constant 0 : index
    %c0_10 = arith.constant 0 : index
    %23 = vector.load %arg4[%c0_9, %c0_10] : memref<32x128xf32, #tpu.memory_space<vmem>>, vector<32x128xf32>
    %cst_11 = arith.constant dense<0.000000e+00> : vector<16x128xf32>
    %24 = tpu.matmul %22, %23, %cst_11 {dimension_numbers = #tpu.dot_dimension_numbers<[1], [0], [0], [1], [0, 0, 1, 1], [], []>} : vector<16x32xf32>, vector<32x128xf32>, vector<16x128xf32> -> vector<16x128xf32>
    %c0_12 = arith.constant 0 : index
    %c0_13 = arith.constant 0 : index
    %25 = vector.load %arg5[%c0_12, %c0_13] : memref<1x128xf32, #tpu.memory_space<vmem>>, vector<1x128xf32>
    %26 = vector.broadcast %25 : vector<1x128xf32> to vector<16x128xf32>
    %27 = arith.addf %24, %26 : vector<16x128xf32>
    %cst_14 = arith.constant 5.000000e-01 : f32
    %28 = vector.broadcast %cst_14 : f32 to vector<16x128xf32>
    %29 = arith.mulf %28, %27 : vector<16x128xf32>
    %cst_15 = arith.constant 0.707106769 : f32
    %30 = vector.broadcast %cst_15 : f32 to vector<16x128xf32>
    %31 = arith.mulf %27, %30 : vector<16x128xf32>
    %32 = math.absf %31 : vector<16x128xf32>
    %cst_16 = arith.constant 0.327591091 : f32
    %33 = vector.broadcast %cst_16 : f32 to vector<16x128xf32>
    %34 = arith.mulf %33, %32 : vector<16x128xf32>
    %cst_17 = arith.constant 1.000000e+00 : f32
    %35 = vector.broadcast %cst_17 : f32 to vector<16x128xf32>
    %36 = arith.addf %35, %34 : vector<16x128xf32>
    %cst_18 = arith.constant 1.000000e+00 : f32
    %37 = vector.broadcast %cst_18 : f32 to vector<16x128xf32>
    %38 = arith.divf %37, %36 : vector<16x128xf32>
    %cst_19 = arith.constant 1.06140542 : f32
    %39 = vector.broadcast %cst_19 : f32 to vector<16x128xf32>
    %40 = arith.mulf %39, %38 : vector<16x128xf32>
    %cst_20 = arith.constant -1.45315206 : f32
    %41 = vector.broadcast %cst_20 : f32 to vector<16x128xf32>
    %42 = arith.addf %40, %41 : vector<16x128xf32>
    %43 = arith.mulf %42, %38 : vector<16x128xf32>
    %cst_21 = arith.constant 1.42141378 : f32
    %44 = vector.broadcast %cst_21 : f32 to vector<16x128xf32>
    %45 = arith.addf %43, %44 : vector<16x128xf32>
    %46 = arith.mulf %45, %38 : vector<16x128xf32>
    %cst_22 = arith.constant -0.284496725 : f32
    %47 = vector.broadcast %cst_22 : f32 to vector<16x128xf32>
    %48 = arith.addf %46, %47 : vector<16x128xf32>
    %49 = arith.mulf %48, %38 : vector<16x128xf32>
    %cst_23 = arith.constant 0.254829586 : f32
    %50 = vector.broadcast %cst_23 : f32 to vector<16x128xf32>
    %51 = arith.addf %49, %50 : vector<16x128xf32>
    %52 = arith.mulf %51, %38 : vector<16x128xf32>
    %cst_24 = arith.constant 0.000000e+00 : f32
    %53 = vector.broadcast %cst_24 : f32 to vector<16x128xf32>
    %54 = arith.subf %53, %32 : vector<16x128xf32>
    %55 = arith.mulf %54, %32 : vector<16x128xf32>
    %56 = math.exp %55 : vector<16x128xf32>
    %57 = arith.mulf %52, %56 : vector<16x128xf32>
    %cst_25 = arith.constant 1.000000e+00 : f32
    %58 = vector.broadcast %cst_25 : f32 to vector<16x128xf32>
    %59 = arith.subf %58, %57 : vector<16x128xf32>
    %cst_26 = arith.constant 0.000000e+00 : f32
    %60 = vector.broadcast %cst_26 : f32 to vector<16x128xf32>
    %61 = arith.cmpf olt, %31, %60 : vector<16x128xf32>
    %cst_27 = arith.constant 0.000000e+00 : f32
    %62 = vector.broadcast %cst_27 : f32 to vector<16x128xf32>
    %63 = arith.subf %62, %59 : vector<16x128xf32>
    %64 = arith.select %61, %63, %59 : vector<16x128xi1>, vector<16x128xf32>
    %cst_28 = arith.constant 1.000000e+00 : f32
    %65 = vector.broadcast %cst_28 : f32 to vector<16x128xf32>
    %66 = arith.addf %65, %64 : vector<16x128xf32>
    %67 = arith.mulf %29, %66 : vector<16x128xf32>
    %c0_29 = arith.constant 0 : index
    %c0_30 = arith.constant 0 : index
    %68 = vector.load %arg6[%c0_29, %c0_30] : memref<128x32xf32, #tpu.memory_space<vmem>>, vector<128x32xf32>
    %cst_31 = arith.constant dense<0.000000e+00> : vector<16x32xf32>
    %69 = tpu.matmul %67, %68, %cst_31 {dimension_numbers = #tpu.dot_dimension_numbers<[1], [0], [0], [1], [0, 0, 1, 1], [], []>} : vector<16x128xf32>, vector<128x32xf32>, vector<16x32xf32> -> vector<16x32xf32>
    %c0_32 = arith.constant 0 : index
    %c0_33 = arith.constant 0 : index
    %70 = vector.load %arg7[%c0_32, %c0_33] : memref<1x32xf32, #tpu.memory_space<vmem>>, vector<1x32xf32>
    %71 = vector.broadcast %70 : vector<1x32xf32> to vector<16x32xf32>
    %72 = arith.addf %69, %71 : vector<16x32xf32>
    %73 = arith.addf %0, %72 : vector<16x32xf32>
    %c0_34 = arith.constant 0 : index
    %c0_35 = arith.constant 0 : index
    %74 = vector.load %arg8[%c0_34, %c0_35] : memref<16x32xf32, #tpu.memory_space<vmem>>, vector<16x32xf32>
    tpu.vector_store %arg8[%c0_34, %c0_35], %73 {strides = array<i32>} : memref<16x32xf32, #tpu.memory_space<vmem>>, vector<16x32xf32>,
    return
  }
  func.func @transform_0(%arg0: i32) -> (i32, i32) {
    %c0_i32 = arith.constant 0 : i32
    %c0_i32_0 = arith.constant 0 : i32
    return %arg0, %c0_i32 : i32, i32
  }
  func.func @transform_1(%arg0: i32) -> (i32, i32) {
    %c0_i32 = arith.constant 0 : i32
    %c0_i32_0 = arith.constant 0 : i32
    %c0_i32_1 = arith.constant 0 : i32
    return %c0_i32, %c0_i32_0 : i32, i32
  }
  func.func @transform_2(%arg0: i32) -> (i32, i32) {
    %c0_i32 = arith.constant 0 : i32
    %c0_i32_0 = arith.constant 0 : i32
    %c0_i32_1 = arith.constant 0 : i32
    return %c0_i32, %c0_i32_0 : i32, i32
  }
  func.func @transform_3(%arg0: i32) -> (i32, i32) {
    %c0_i32 = arith.constant 0 : i32
    %c0_i32_0 = arith.constant 0 : i32
    %c0_i32_1 = arith.constant 0 : i32
    return %c0_i32, %c0_i32_0 : i32, i32
  }
  func.func @transform_4(%arg0: i32) -> (i32, i32) {
    %c0_i32 = arith.constant 0 : i32
    %c0_i32_0 = arith.constant 0 : i32
    %c0_i32_1 = arith.constant 0 : i32
    return %c0_i32, %c0_i32_0 : i32, i32
  }
  func.func @transform_5(%arg0: i32) -> (i32, i32) {
    %c0_i32 = arith.constant 0 : i32
    %c0_i32_0 = arith.constant 0 : i32
    %c0_i32_1 = arith.constant 0 : i32
    return %c0_i32, %c0_i32_0 : i32, i32
  }
  func.func @transform_6(%arg0: i32) -> (i32, i32) {
    %c0_i32 = arith.constant 0 : i32
    %c0_i32_0 = arith.constant 0 : i32
    %c0_i32_1 = arith.constant 0 : i32
    return %c0_i32, %c0_i32_0 : i32, i32
  }
  func.func @transform_7(%arg0: i32) -> (i32, i32) {
    %c0_i32 = arith.constant 0 : i32
    %c0_i32_0 = arith.constant 0 : i32
    return %arg0, %c0_i32 : i32, i32
  }
}

</mosaic_0001>

<llo_original>
// kernel: tpu_custom_call.1
$region0: #{tpu_custom_call.1}
  #allocation0 [shape = 'u32[]', space=smem, size = 0x4, offset = 0x4, fixed_abs, tag = 'smem constant byte address 0x4 - core index']
  #allocation1 [shape = 'u32[72,128]{1,0:T(1,128)}', space=vmem, size = 0x9000, scoped, tag = 'internal scratch']
  %s0 = inlined_call_operand.vmem [shape: f32[16,32], index: 0, kind: input, shape index: {}]
  %s1 = inlined_call_operand.vmem [shape: f32[1,32], index: 1, kind: input, shape index: {}]
  %s2 = inlined_call_operand.vmem [shape: f32[1,32], index: 2, kind: input, shape index: {}]
  %s3 = inlined_call_operand.vmem [shape: f32[32,128], index: 3, kind: input, shape index: {}]
  %s4 = inlined_call_operand.vmem [shape: f32[1,128], index: 4, kind: input, shape index: {}]
  %s5 = inlined_call_operand.vmem [shape: f32[128,32], index: 5, kind: input, shape index: {}]
  %s6 = inlined_call_operand.vmem [shape: f32[1,32], index: 6, kind: input, shape index: {}]
  %s7 = inlined_call_operand.hbm [shape: f32[16,32], index: 7, kind: output, shape index: {}]
  %s8 = sld [smem:[#allocation0]]
  $region38: #{tpu_custom_call.1} parent=0
    _
  %s10 = ssub.s32 1, %s8
  %s11 = scalar_select 0, %s10, %s8
  $region1: #{tpu_custom_call.1} parent=0
    #allocation2 [shape = 'u8[8192]{0}', space=vmem, size = 0x2000, scoped, tag = 'output window, operand 0, single buffered']
    #allocation3 [shape = 's32[1]{0}', space=sflag, size = 0x4, scoped, tag = 'scoped memory for tpu_custom_call.1']
    %12 = vsyncpa [#allocation3], 0
    // Predicated region
    $region2: #{tpu_custom_call.1} parent=1 // pred_check
      _
    $region3: #{tpu_custom_call.1} parent=1 // pred_check_branch
      %14 = sbr.rel (0) target = $region5
    $region4: #{tpu_custom_call.1} parent=1 // pred_region
      _
    $region5: #{tpu_custom_call.1} parent=1 // pred_fallthru
      _
    // Predicated region
    $region6: #{tpu_custom_call.1} parent=1 // pred_check
      _
    $region7: #{tpu_custom_call.1} parent=1 // pred_check_branch
      %16 = sbr.rel (0) target = $region9
    $region8: #{tpu_custom_call.1} parent=1 // pred_region
      _
    $region9: #{tpu_custom_call.1} parent=1 // pred_fallthru
      _
    // Predicated region
    $region10: #{tpu_custom_call.1} parent=1 // pred_check
      _
    $region11: #{tpu_custom_call.1} parent=1 // pred_check_branch
      %18 = sbr.rel (0) target = $region13
    $region12: #{tpu_custom_call.1} parent=1 // pred_region
      _
    $region13: #{tpu_custom_call.1} parent=1 // pred_fallthru
      _
    // Predicated region
    $region14: #{tpu_custom_call.1} parent=1 // pred_check
      _
    $region15: #{tpu_custom_call.1} parent=1 // pred_check_branch
      %20 = sbr.rel (0) target = $region17
    $region16: #{tpu_custom_call.1} parent=1 // pred_region
      _
    $region17: #{tpu_custom_call.1} parent=1 // pred_fallthru
      _
    // Predicated region
    $region18: #{tpu_custom_call.1} parent=1 // pred_check
      _
    $region19: #{tpu_custom_call.1} parent=1 // pred_check_branch
      %22 = sbr.rel (0) target = $region21
    $region20: #{tpu_custom_call.1} parent=1 // pred_region
      _
    $region21: #{tpu_custom_call.1} parent=1 // pred_fallthru
      _
    // Predicated region
    $region22: #{tpu_custom_call.1} parent=1 // pred_check
      _
    $region23: #{tpu_custom_call.1} parent=1 // pred_check_branch
      %24 = sbr.rel (0) target = $region25
    $region24: #{tpu_custom_call.1} parent=1 // pred_region
      _
    $region25: #{tpu_custom_call.1} parent=1 // pred_fallthru
      _
    // Predicated region
    $region26: #{tpu_custom_call.1} parent=1 // pred_check
      _
    $region27: #{tpu_custom_call.1} parent=1 // pred_check_branch
      %26 = sbr.rel (0) target = $region29
    $region28: #{tpu_custom_call.1} parent=1 // pred_region
      _
    $region29: #{tpu_custom_call.1} parent=1 // pred_fallthru
      _
    %v27 = vld [vmem:[%s0] sm:$0xff]
    %v28 = vld [vmem:[%s0 + $0x8] sm:$0xff]
    %vm29 = vcmask 261120
    %v30 = vsel %vm29, %v27, 0.0
    %31 = vadd.xlane.f32.xlu0 %v30
    %v32 = vpop.xlane.xlu0 %31
    %v33 = vsel %vm29, %v28, 0.0
    %34 = vadd.xlane.f32.xlu0 %v33
    %v35 = vpop.xlane.xlu0 %34
    %v36 = vrcp.pop 32.0
    %v37 = vmul.f32 32.0, %v36
    %v38 = vsub.f32 1.0, %v37
    %v39 = vmul.f32 %v36, %v38
    %v40 = vadd.f32 %v36, %v39
    %vm41 = vweird.f32 %v36
    %v42 = vsel %vm41, %v36, %v40
    %v43 = vmul.f32 %v32, %v42
    %v44 = vmul.f32 %v35, %v42
    %v45 = vsub.f32 %v27, %v43
    %v46 = vsub.f32 %v28, %v44
    %v47 = vmul.f32 %v45, %v45
    %v48 = vmul.f32 %v46, %v46
    %v49 = vsel %vm29, %v47, 0.0
    %50 = vadd.xlane.f32.xlu0 %v49
    %v51 = vpop.xlane.xlu0 %50
    %v52 = vsel %vm29, %v48, 0.0
    %53 = vadd.xlane.f32.xlu0 %v52
    %v54 = vpop.xlane.xlu0 %53
    %v55 = vmul.f32 %v51, %v42
    %v56 = vmul.f32 %v54, %v42
    %v57 = vadd.f32 %v55, 1e-05
    %v58 = vadd.f32 %v56, 1e-05
    %v59 = vrsqrt.pop %v57
    %v60 = vmul.f32 %v59, %v57
    %v61 = vmul.f32 %v60, %v59
    %v62 = vmul.f32 0.5, %v61
    %v63 = vsub.f32 1.5, %v62
    %v64 = vmul.f32 %v59, %v63
    %vm65 = vweird.f32 %v57
    %vm66 = vweird.f32 %v59
    %vm67 = vmor %vm65, %vm66
    %v68 = vsel %vm67, %v59, %v64
    %v69 = vrsqrt.pop %v58
    %v70 = vmul.f32 %v69, %v58
    %v71 = vmul.f32 %v70, %v69
    %v72 = vmul.f32 0.5, %v71
    %v73 = vsub.f32 1.5, %v72
    %v74 = vmul.f32 %v69, %v73
    %vm75 = vweird.f32 %v58
    %vm76 = vweird.f32 %v69
    %vm77 = vmor %vm75, %vm76
    %v78 = vsel %vm77, %v69, %v74
    %v79 = vmul.f32 %v45, %v68
    %v80 = vmul.f32 %v46, %v78
    %v81 = vld [vmem:[%s1] sm:$0x1]
    %v83 = vperm.slane %v81, 0
    %v85 = vmul.f32 %v79, %v83
    %v86 = vmul.f32 %v80, %v83
    %v87 = vld [vmem:[%s2] sm:$0x1]
    %v89 = vperm.slane %v87, 0
    %v91 = vadd.f32 %v85, %v89
    %v92 = vadd.f32 %v86, %v89
    %v93 = vld [vmem:[%s3] sm:$0xff]
    %v94 = vld [vmem:[%s3 + $0x8] sm:$0xff]
    %v95 = vld [vmem:[%s3 + $0x10] sm:$0xff]
    %v96 = vld [vmem:[%s3 + $0x18] sm:$0xff]
    %v97 = vld [vmem:[%s4] sm:$0x1]
    %v99 = vperm.slane %v97, 0
    %v102 = vsel %vm29, %v91, 0
    %v105 = vsel %vm29, %v92, 0
    %107 = vmatpush.msra.mxu0 0.0
    %108 = vmatpush.msra.mxu0 0.0
    %109 = vmatpush.msra.mxu0 0.0
    %110 = vmatpush.msra.mxu0 0.0
    %111 = vmatpush.msra.mxu0 0.0
    %112 = vmatpush.msra.mxu0 0.0
    %113 = vmatpush.msra.mxu0 0.0
    %114 = vmatpush.msra.mxu0 0.0
    %115 = vmatpush.msra.mxu0 0.0
    %116 = vmatpush.msra.mxu0 0.0
    %117 = vmatpush.msra.mxu0 0.0
    %118 = vmatpush.msra.mxu0 0.0
    %119 = vmatpush.msra.mxu0 %v96
    %120 = vmatpush.msra.mxu0 %v95
    %121 = vmatpush.msra.mxu0 %v94
    %122 = vmatpush.msra.mxu0 %v93
    %123 = vmatmul.f32.gmra.mxu0 %v102
    %v124 = vpop.f32.mrf.mxu0
    %v125 = vadd.f32 %v99, %v124
    %126 = vmatmul.f32.gmra.mxu0 %v105
    %v127 = vpop.f32.mrf.mxu0
    %v128 = vadd.f32 %v99, %v127
    %129 = vdwg.mxu0
    %v130 = vmul.f32 %v125, 0.5
    %v131 = vmul.f32 %v128, 0.5
    %v132 = vmul.f32 %v125, 0.70710677
    %v133 = vmul.f32 %v128, 0.70710677
    %v134 = vand.u32 2147483647, %v132
    %v135 = vand.u32 2147483647, %v133
    %v136 = vmul.f32 %v134, 0.3275911
    %v137 = vmul.f32 %v135, 0.3275911
    %v138 = vadd.f32 %v136, 1.0
    %v139 = vadd.f32 %v137, 1.0
    %v140 = vrcp.pop %v138
    %v141 = vmul.f32 %v138, %v140
    %v142 = vsub.f32 1.0, %v141
    %v143 = vmul.f32 %v140, %v142
    %v144 = vadd.f32 %v140, %v143
    %vm145 = vweird.f32 %v138
    %vm146 = vweird.f32 %v140
    %vm147 = vmor %vm145, %vm146
    %v148 = vsel %vm147, %v140, %v144
    %v149 = vand.u32 2147483647, %v138
    %vm150 = vcmp.eq.f32.partialorder %v149, 8.507059e+37
    %v151 = vand.u32 %v138, 2147483648
    %v152 = vor.u32 1.1754944e-38, %v151
    %v153 = vsel %vm150, %v152, %v148
    %v154 = vmul.f32 1.0, %v153
    %v155 = vrcp.pop %v139
    %v156 = vmul.f32 %v139, %v155
    %v157 = vsub.f32 1.0, %v156
    %v158 = vmul.f32 %v155, %v157
    %v159 = vadd.f32 %v155, %v158
    %vm160 = vweird.f32 %v139
    %vm161 = vweird.f32 %v155
    %vm162 = vmor %vm160, %vm161
    %v163 = vsel %vm162, %v155, %v159
    %v164 = vand.u32 2147483647, %v139
    %vm165 = vcmp.eq.f32.partialorder %v164, 8.507059e+37
    %v166 = vand.u32 %v139, 2147483648
    %v167 = vor.u32 1.1754944e-38, %v166
    %v168 = vsel %vm165, %v167, %v163
    %v169 = vmul.f32 1.0, %v168
    %v170 = vmul.f32 %v154, 1.0614054
    %v171 = vmul.f32 %v169, 1.0614054
    %v172 = vadd.f32 %v170, -1.4531521
    %v173 = vadd.f32 %v171, -1.4531521
    %v174 = vmul.f32 %v172, %v154
    %v175 = vmul.f32 %v173, %v169
    %v176 = vadd.f32 %v174, 1.4214138
    %v177 = vadd.f32 %v175, 1.4214138
    %v178 = vmul.f32 %v176, %v154
    %v179 = vmul.f32 %v177, %v169
    %v180 = vadd.f32 %v178, -0.28449672
    %v181 = vadd.f32 %v179, -0.28449672
    %v182 = vmul.f32 %v180, %v154
    %v183 = vmul.f32 %v181, %v169
    %v184 = vadd.f32 %v182, 0.2548296
    %v185 = vadd.f32 %v183, 0.2548296
    %v186 = vmul.f32 %v184, %v154
    %v187 = vmul.f32 %v185, %v169
    %v188 = vsub.f32 0.0, %v134
    %v189 = vsub.f32 0.0, %v135
    %v190 = vmul.f32 %v188, %v134
    %v191 = vmul.f32 %v189, %v135
    %v192 = vmul.f32 %v190, 1.442695
    %v193 = vpow.pop %v192
    %v194 = vmul.f32 %v191, 1.442695
    %v195 = vpow.pop %v194
    %v196 = vmul.f32 %v186, %v193
    %v197 = vmul.f32 %v187, %v195
    %v198 = vsub.f32 1.0, %v196
    %v199 = vsub.f32 1.0, %v197
    %vm200 = vcmp.lt.f32.partialorder %v132, 0.0
    %vm201 = vcmp.lt.f32.partialorder %v133, 0.0
    %v202 = vsub.f32 0.0, %v198
    %v203 = vsub.f32 0.0, %v199
    %v204 = vsel %vm200, %v202, %v198
    %v205 = vsel %vm201, %v203, %v199
    %v206 = vadd.f32 %v204, 1.0
    %v207 = vadd.f32 %v205, 1.0
    %v208 = vmul.f32 %v130, %v206
    %v209 = vmul.f32 %v131, %v207
    %v210 = vld [vmem:[%s5] sm:$0xff]
    %v211 = vld [vmem:[%s5 + $0x8] sm:$0xff]
    %v212 = vld [vmem:[%s5 + $0x10] sm:$0xff]
    %v213 = vld [vmem:[%s5 + $0x18] sm:$0xff]
    %v214 = vld [vmem:[%s5 + $0x20] sm:$0xff]
    %v215 = vld [vmem:[%s5 + $0x28] sm:$0xff]
    %v216 = vld [vmem:[%s5 + $0x30] sm:$0xff]
    %v217 = vld [vmem:[%s5 + $0x38] sm:$0xff]
    %v218 = vld [vmem:[%s5 + $0x40] sm:$0xff]
    %v219 = vld [vmem:[%s5 + $0x48] sm:$0xff]
    %v220 = vld [vmem:[%s5 + $0x50] sm:$0xff]
    %v221 = vld [vmem:[%s5 + $0x58] sm:$0xff]
    %v222 = vld [vmem:[%s5 + $0x60] sm:$0xff]
    %v223 = vld [vmem:[%s5 + $0x68] sm:$0xff]
    %v224 = vld [vmem:[%s5 + $0x70] sm:$0xff]
    %v225 = vld [vmem:[%s5 + $0x78] sm:$0xff]
    %v226 = vld [vmem:[%s6] sm:$0x1]
    %v228 = vperm.slane %v226, 0
    %230 = vmatpush.msra.mxu0 %v225
    %231 = vmatpush.msra.mxu0 %v224
    %232 = vmatpush.msra.mxu0 %v223
    %233 = vmatpush.msra.mxu0 %v222
    %234 = vmatpush.msra.mxu0 %v221
    %235 = vmatpush.msra.mxu0 %v220
    %236 = vmatpush.msra.mxu0 %v219
    %237 = vmatpush.msra.mxu0 %v218
    %238 = vmatpush.msra.mxu0 %v217
    %239 = vmatpush.msra.mxu0 %v216
    %240 = vmatpush.msra.mxu0 %v215
    %241 = vmatpush.msra.mxu0 %v214
    %242 = vmatpush.msra.mxu0 %v213
    %243 = vmatpush.msra.mxu0 %v212
    %244 = vmatpush.msra.mxu0 %v211
    %245 = vmatpush.msra.mxu0 %v210
    %246 = vmatmul.f32.gmra.mxu0 %v208
    %v247 = vpop.f32.mrf.mxu0
    %v248 = vadd.f32 %v228, %v247
    %249 = vmatmul.f32.gmra.mxu0 %v209
    %v250 = vpop.f32.mrf.mxu0
    %v251 = vadd.f32 %v228, %v250
    %252 = vdwg.mxu0
    %v253 = vadd.f32 %v27, %v248
    %v254 = vadd.f32 %v28, %v251
    %255 = vst.msk [vmem:[#allocation2] sm:$0xff] %vm29, %v253
    %256 = vst.msk [vmem:[#allocation2 + $0x8] sm:$0xff] %vm29, %v254
    // Predicated region
    $region30: #{tpu_custom_call.1} parent=1 // pred_check
      _
    $region31: #{tpu_custom_call.1} parent=1 // pred_check_branch
      %258 = sbr.rel (0) target = $region33
    $region32: #{tpu_custom_call.1} parent=1 // pred_region
      %260 = vsyncadd [#allocation3], 0
      %s261 = sshll.u32 [#allocation2], 4
      %s262 = int_to_ptr.vmem [resolvable:$true] %s261
      %s263 = sshll.u32 %s7, 4
      %s264 = int_to_ptr.hbm [resolvable:$true] %s263
      %269 = dma.vmem_to_hbm [thread:$0]  %s262, 256, %s264, [#allocation3], 128, 128, 8
    $region33: #{tpu_custom_call.1} parent=1 // pred_fallthru
      _
    // Predicated region
    $region34: #{tpu_custom_call.1} parent=1 // pred_check
      _
    $region35: #{tpu_custom_call.1} parent=1 // pred_check_branch
      %271 = sbr.rel (0) target = $region37
    $region36: #{tpu_custom_call.1} parent=1 // pred_region
      %273 = dma.done [#allocation3], 256
    $region37: #{tpu_custom_call.1} parent=1 // pred_fallthru
      _
    %274 = vsyncpa [#allocation3], 1

</llo_original>
